<compile_context>
chip_gen: v7x
topology: tpu7x:2x2x1
jax: 0.10.0
libtpu: 0.0.40
codegen_flags: <defaults>
</compile_context>

<pallas_src>
import jax
import jax.numpy as jnp
from jax import lax
from jax.experimental import pallas as pl
from jax.experimental.pallas import tpu as pltpu

_LANES = 512            # lane-dense last dim (multiple of 128)
_MAX_TILE_ROWS = 2048   # 2048 x 512 x 4 B = 4 MiB f32 block per input tile
_NUM_CORES = 2          # partial-sum split: ~2x on v7x (2 TCs), neutral elsewhere


def _round_up(x, m):
    return ((x + m - 1) // m) * m


def _l1_sum_kernel(pred_ref, mask_ref, out_ref, acc_ref):
    """Per-core partial sum of |pred - mask| with a VMEM vector accumulator."""
    i = pl.program_id(1)

    @pl.when(i == 0)
    def _():
        acc_ref[...] = jnp.zeros_like(acc_ref)

    # uint8 -> f32 cast happens in-kernel: mask costs 1 B/elem of HBM traffic.
    acc_ref[...] += jnp.abs(pred_ref[...] - mask_ref[...].astype(jnp.float32))

    @pl.when(i == pl.num_programs(1) - 1)
    def _():
        s = jnp.sum(acc_ref[...])                         # one final XLU reduce
        r = lax.broadcasted_iota(jnp.int32, (8, 128), 0)
        c = lax.broadcasted_iota(jnp.int32, (8, 128), 1)
        # Scalar partial sum placed in the [0, 0] corner of an aligned block.
        out_ref[...] = jnp.where((r == 0) & (c == 0), s, jnp.float32(0.0))


def l1_loss_pallas(pred_flat, mask_flat, total_elems,
                   lanes=_LANES, max_tile_rows=_MAX_TILE_ROWS,
                   num_cores=_NUM_CORES):
    """Mean |pred - mask| over `total_elems` true elements.

    pred_flat: float32 (N,) flattened predictions.
    mask_flat: uint8   (N,) flattened GT mask (cast to f32 inside the kernel).
    """
    n = pred_flat.shape[0]
    assert mask_flat.shape[0] == n

    n_rows = pl.cdiv(n, lanes)
    rows_per_core_min = pl.cdiv(n_rows, num_cores)
    # tile_rows multiple of 32 satisfies both the f32 (8) and uint8 (32)
    # sublane tiling requirements.
    tile_rows = min(max_tile_rows, _round_up(rows_per_core_min, 32))
    steps = pl.cdiv(rows_per_core_min, tile_rows)
    rows_per_core = steps * tile_rows
    rows_total = num_cores * rows_per_core
    padded = rows_total * lanes

    if padded != n:
        pad = padded - n
        # Zero padding contributes |0 - 0| = 0 to the sum; the mean divides by
        # the TRUE element count below.
        pred_flat = jnp.pad(pred_flat, (0, pad))
        mask_flat = jnp.pad(mask_flat, (0, pad))

    pred2d = pred_flat.reshape(rows_total, lanes)
    mask2d = mask_flat.reshape(rows_total, lanes)

    partial = pl.pallas_call(
        _l1_sum_kernel,
        out_shape=jax.ShapeDtypeStruct((num_cores * 8, 128), jnp.float32),
        grid_spec=pltpu.PrefetchScalarGridSpec(
            num_scalar_prefetch=0,
            grid=(num_cores, steps),
            in_specs=[
                pl.BlockSpec((tile_rows, lanes),
                             lambda c, i, s=steps: (c * s + i, 0)),
                pl.BlockSpec((tile_rows, lanes),
                             lambda c, i, s=steps: (c * s + i, 0)),
            ],
            out_specs=pl.BlockSpec((8, 128), lambda c, i: (c, 0)),
            scratch_shapes=[pltpu.VMEM((tile_rows, lanes), jnp.float32)],
        ),
        compiler_params=pltpu.CompilerParams(
            dimension_semantics=("parallel", "arbitrary"),
            vmem_limit_bytes=32 * 1024 * 1024,
        ),
    )(pred2d, mask2d)

    # Tiny cross-core add + divide by the true element count (plain JAX).
    return jnp.sum(partial) / jnp.float32(total_elems)


def simple_trainer_forward(pred_ws, gt_mask):
    """JAX/Pallas equivalent of SimpleTrainer.forward's loss computation.

    pred_ws: float32 (B, 1, H, W)  -- predicted silhouette (NCHW).
    gt_mask: bool    (B, H, W)     -- GT alpha mask (self.mask).
    Returns: {'mask': scalar float32}
             (== torch.nn.L1Loss()(pred_ws[:, 0], gt_mask.float()))
    """
    B, C, H, W = pred_ws.shape
    pred_flat = pred_ws[:, 0].reshape(-1).astype(jnp.float32)   # pred_ws[:, 0]
    mask_flat = gt_mask.reshape(-1).astype(jnp.uint8)           # f32 cast in-kernel
    loss = l1_loss_pallas(pred_flat, mask_flat, B * H * W)
    return {"mask": loss}


if __name__ == "__main__":
    key = jax.random.PRNGKey(0)
    k1, k2 = jax.random.split(key)

    B, H, W = 2, 16, 16
    # Predicted silhouette in [0, 1], NCHW with a single channel.
    pred_ws = jax.random.uniform(k1, (B, 1, H, W), dtype=jnp.float32)
    # Boolean GT mask (as produced by prepare_embeddings: alpha > 0.5).
    gt_mask = jax.random.uniform(k2, (B, H, W), dtype=jnp.float32) > 0.5

    forward = jax.jit(simple_trainer_forward)
    losses = forward(pred_ws, gt_mask)
    loss_val = jax.block_until_ready(losses["mask"])

    # Reference check in plain JAX (torch.nn.L1Loss default reduction='mean').
    ref = jnp.mean(jnp.abs(pred_ws[:, 0] - gt_mask.astype(jnp.float32)))
    assert jnp.allclose(loss_val, ref, atol=1e-6), (loss_val, ref)

    print("KERNEL_OK")
</pallas_src>

<mosaic_0001>
module attributes {stable_mosaic.version = 11 : i64} {
  func.func @_l1_sum_kernel(%arg0: i32, %arg1: i32, %arg2: memref<32x512xf32, #tpu.memory_space<vmem>>, %arg3: memref<32x512xi8, #tpu.memory_space<vmem>>, %arg4: memref<8x128xf32, #tpu.memory_space<vmem>>, %arg5: memref<32x512xf32, #tpu.memory_space<vmem>>) attributes {dimension_semantics = [#tpu.dimension_semantics<parallel>, #tpu.dimension_semantics<arbitrary>], iteration_bounds = array<i64: 2, 1>, scalar_prefetch = 0 : i64, scratch_operands = 1 : i64, tpu.core_type = #tpu.core_type<tc>, window_params = [{transform_indices = @transform_0, window_bounds = array<i64: 32, 512>}, {transform_indices = @transform_1, window_bounds = array<i64: 32, 512>}, {transform_indices = @transform_2, window_bounds = array<i64: 8, 128>}]} {
    %c0_i32 = arith.constant 0 : i32
    %0 = arith.cmpi eq, %arg1, %c0_i32 : i32
    %1 = arith.extui %0 : i1 to i32
    %c0_i32_0 = arith.constant 0 : i32
    %2 = arith.cmpi ne, %1, %c0_i32_0 : i32
    scf.if %2 {
      %cst = arith.constant 0.000000e+00 : f32
      %14 = vector.broadcast %cst : f32 to vector<32x512xf32>
      %c0_10 = arith.constant 0 : index
      %c0_11 = arith.constant 0 : index
      %15 = vector.load %arg5[%c0_10, %c0_11] : memref<32x512xf32, #tpu.memory_space<vmem>>, vector<32x512xf32>
      tpu.vector_store %arg5[%c0_10, %c0_11], %14 {strides = array<i32>} : memref<32x512xf32, #tpu.memory_space<vmem>>, vector<32x512xf32>,
    } else {
    }
    %c0 = arith.constant 0 : index
    %c0_1 = arith.constant 0 : index
    %3 = vector.load %arg5[%c0, %c0_1] : memref<32x512xf32, #tpu.memory_space<vmem>>, vector<32x512xf32>
    %c0_2 = arith.constant 0 : index
    %c0_3 = arith.constant 0 : index
    %4 = vector.load %arg2[%c0_2, %c0_3] : memref<32x512xf32, #tpu.memory_space<vmem>>, vector<32x512xf32>
    %c0_4 = arith.constant 0 : index
    %c0_5 = arith.constant 0 : index
    %5 = vector.load %arg3[%c0_4, %c0_5] : memref<32x512xi8, #tpu.memory_space<vmem>>, vector<32x512xi8>
    %6 = arith.uitofp %5 : vector<32x512xi8> to vector<32x512xf32>
    %7 = arith.subf %4, %6 : vector<32x512xf32>
    %8 = math.absf %7 : vector<32x512xf32>
    %9 = arith.addf %3, %8 : vector<32x512xf32>
    %c0_6 = arith.constant 0 : index
    %c0_7 = arith.constant 0 : index
    %10 = vector.load %arg5[%c0_6, %c0_7] : memref<32x512xf32, #tpu.memory_space<vmem>>, vector<32x512xf32>
    tpu.vector_store %arg5[%c0_6, %c0_7], %9 {strides = array<i32>} : memref<32x512xf32, #tpu.memory_space<vmem>>, vector<32x512xf32>,
    %c0_i32_8 = arith.constant 0 : i32
    %11 = arith.cmpi eq, %arg1, %c0_i32_8 : i32
    %12 = arith.extui %11 : i1 to i32
    %c0_i32_9 = arith.constant 0 : i32
    %13 = arith.cmpi ne, %12, %c0_i32_9 : i32
    scf.if %13 {
      %c0_10 = arith.constant 0 : index
      %c0_11 = arith.constant 0 : index
      %14 = vector.load %arg5[%c0_10, %c0_11] : memref<32x512xf32, #tpu.memory_space<vmem>>, vector<32x512xf32>
      %15 = vector.shape_cast %14 : vector<32x512xf32> to vector<1x32x512xf32>
      %cst = arith.constant dense<0.000000e+00> : vector<1xf32>
      %16 = vector.multi_reduction <add>, %15, %cst [1, 2] : vector<1x32x512xf32> to vector<1xf32>
      %17 = vector.shape_cast %16 : vector<1xf32> to vector<1x1x1xf32>
      %18 = vector.extract %17[0, 0, 0] : f32 from vector<1x1x1xf32>
      %19 = tpu.iota {dimensions = array<i32: 0>} : vector<8x128xi32>
      %20 = tpu.iota {dimensions = array<i32: 1>} : vector<8x128xi32>
      %c0_i32_12 = arith.constant 0 : i32
      %21 = vector.broadcast %c0_i32_12 : i32 to vector<8x128xi32>
      %22 = arith.cmpi eq, %19, %21 : vector<8x128xi32>
      %c0_i32_13 = arith.constant 0 : i32
      %23 = vector.broadcast %c0_i32_13 : i32 to vector<8x128xi32>
      %24 = arith.cmpi eq, %20, %23 : vector<8x128xi32>
      %25 = arith.andi %22, %24 : vector<8x128xi1>
      %cst_14 = arith.constant 0.000000e+00 : f32
      %26 = vector.broadcast %18 : f32 to vector<8x128xf32>
      %27 = vector.broadcast %cst_14 : f32 to vector<8x128xf32>
      %28 = arith.select %25, %26, %27 : vector<8x128xi1>, vector<8x128xf32>
      %c0_15 = arith.constant 0 : index
      %c0_16 = arith.constant 0 : index
      %29 = vector.load %arg4[%c0_15, %c0_16] : memref<8x128xf32, #tpu.memory_space<vmem>>, vector<8x128xf32>
      tpu.vector_store %arg4[%c0_15, %c0_16], %28 {strides = array<i32>} : memref<8x128xf32, #tpu.memory_space<vmem>>, vector<8x128xf32>,
    } else {
    }
    return
  }
  func.func @transform_0(%arg0: i32, %arg1: i32) -> (i32, i32) {
    %c1_i32 = arith.constant 1 : i32
    %0 = arith.muli %arg0, %c1_i32 : i32
    %1 = arith.addi %0, %arg1 : i32
    %c0_i32 = arith.constant 0 : i32
    %c0_i32_0 = arith.constant 0 : i32
    return %1, %c0_i32 : i32, i32
  }
  func.func @transform_1(%arg0: i32, %arg1: i32) -> (i32, i32) {
    %c1_i32 = arith.constant 1 : i32
    %0 = arith.muli %arg0, %c1_i32 : i32
    %1 = arith.addi %0, %arg1 : i32
    %c0_i32 = arith.constant 0 : i32
    %c0_i32_0 = arith.constant 0 : i32
    return %1, %c0_i32 : i32, i32
  }
  func.func @transform_2(%arg0: i32, %arg1: i32) -> (i32, i32) {
    %c0_i32 = arith.constant 0 : i32
    %c0_i32_0 = arith.constant 0 : i32
    return %arg0, %c0_i32 : i32, i32
  }
}

</mosaic_0001>

<llo_original>
// kernel: squeeze.1
$region0: #{squeeze.1}
  %s0 = inlined_call_operand.hbm [shape: f32[2,1,16,16], index: 0, kind: input, shape index: {}]
  %s1 = inlined_call_operand.vmem [shape: f32[512], index: 1, kind: output, shape index: {}]
  $region1: #{squeeze.1} parent=0
    #allocation0 [shape = 'u8[16384]{0}', space=vmem, size = 0x4000, scoped, tag = 'operand span for operand 0']
    #allocation1 [shape = 's32[1]{0}', space=sflag, size = 0x4, scoped, tag = 'scoped memory for squeeze.1']
    #allocation2 [shape = 'u8[4096]{0}', space=vmem, size = 0x1000, scoped, tag = 'scoped mem for output reshape']
    %2 = vsyncpa [#allocation1], 0
    %s4 = ssub.s32 512, 512
    %5 = vsyncadd [#allocation1], %s4
    %s7 = sshll.u32 [#allocation0], 4
    %s8 = int_to_ptr.vmem [resolvable:$true] %s7
    %10 = dma.hbm_to_vmem [thread:$0]  %s0, 512, %s8, [#allocation1]
    %11 = dma.done [#allocation1], 512
    %v12 = vld [vmem:[#allocation0] ss:$8 sm:$0xf]
    %vm13 = vcmask 130048
    %14 = vst.msk [vmem:[#allocation2] sm:$0xf] %vm13, %v12
    %s15 = scalar_lea.vmem [#allocation0], 7
    %v16 = vld [vmem:[%s15] ss:$8 sm:$0xf]
    %17 = vrot.lane.b32.xlu0 %v16, 112
    %v18 = vpop.permute.xlu0 %17
    %vm19 = vcmask 1048448
    %20 = vst.msk [vmem:[#allocation2] sm:$0xf] %vm19, %v18
    %s21 = scalar_lea.vmem [#allocation0], 6
    %v22 = vld [vmem:[%s21] ss:$8 sm:$0xf]
    %23 = vrot.lane.b32.xlu0 %v22, 96
    %v24 = vpop.permute.xlu0 %23
    %vm25 = vcmask 917248
    %26 = vst.msk [vmem:[#allocation2] sm:$0xf] %vm25, %v24
    %s27 = scalar_lea.vmem [#allocation0], 5
    %v28 = vld [vmem:[%s27] ss:$8 sm:$0xf]
    %29 = vrot.lane.b32.xlu0 %v28, 80
    %v30 = vpop.permute.xlu0 %29
    %vm31 = vcmask 786048
    %32 = vst.msk [vmem:[#allocation2] sm:$0xf] %vm31, %v30
    %s33 = scalar_lea.vmem [#allocation0], 4
    %v34 = vld [vmem:[%s33] ss:$8 sm:$0xf]
    %35 = vrot.lane.b32.xlu0 %v34, 64
    %v36 = vpop.permute.xlu0 %35
    %vm37 = vcmask 654848
    %38 = vst.msk [vmem:[#allocation2] sm:$0xf] %vm37, %v36
    %s39 = scalar_lea.vmem [#allocation0], 3
    %v40 = vld [vmem:[%s39] ss:$8 sm:$0xf]
    %41 = vrot.lane.b32.xlu0 %v40, 48
    %v42 = vpop.permute.xlu0 %41
    %vm43 = vcmask 523648
    %44 = vst.msk [vmem:[#allocation2] sm:$0xf] %vm43, %v42
    %s45 = scalar_lea.vmem [#allocation0], 2
    %v46 = vld [vmem:[%s45] ss:$8 sm:$0xf]
    %47 = vrot.lane.b32.xlu0 %v46, 32
    %v48 = vpop.permute.xlu0 %47
    %vm49 = vcmask 392448
    %50 = vst.msk [vmem:[#allocation2] sm:$0xf] %vm49, %v48
    %s51 = scalar_lea.vmem [#allocation0], 1
    %v52 = vld [vmem:[%s51] ss:$8 sm:$0xf]
    %53 = vrot.lane.b32.xlu0 %v52, 16
    %v54 = vpop.permute.xlu0 %53
    %vm55 = vcmask 261248
    %56 = vst.msk [vmem:[#allocation2] sm:$0xf] %vm55, %v54
    %s58 = sshllo.u32 0, 4
    %v60 = vld [vmem:[#allocation2] sm:%s58]
    %s61 = sshllo.u32 0, 4
    %62 = vst [vmem:[%s1] sm:%s61] %v60
    %63 = vsyncpa [#allocation1], 1

// kernel: simple_trainer_forward.1
$region0: #{simple_trainer_forward.1}
  #allocation0 [shape = 'u32[]', space=smem, size = 0x4, offset = 0x4, fixed_abs, tag = 'smem constant byte address 0x4 - core index']
  #allocation1 [shape = 'u32[144,128]{1,0:T(1,128)}', space=vmem, size = 0x12000, scoped, tag = 'internal scratch']
  #allocation2 [shape = 'f32[32,512]{1,0:T(8,128)}', space=vmem, size = 0x10000, scoped, tag = 'scratch operand']
  %s0 = inlined_call_operand.vmem [shape: f32[64,512], index: 0, kind: input, shape index: {}]
  %s1 = inlined_call_operand.vmem [shape: u8[64,512], index: 1, kind: input, shape index: {}]
  %s2 = inlined_call_operand.vmem [shape: f32[16,128], index: 2, kind: output, shape index: {}]
  %s3 = sld [smem:[#allocation0]]
  $region49: #{simple_trainer_forward.1} parent=0
    _
  %s5 = ssub.s32 1, %s3
  %s6 = scalar_select 0, %s5, %s3
  loop: start=0, step=1, limit=4
  $region2: #{simple_trainer_forward.1} parent=0 // loop_pre_header
    _
  $region3: #{simple_trainer_forward.1} parent=0 // loop_header
    %s8 = sphi 0, %s12
    %p9 = scmp.ge.s32.totalorder %s8, 4
    %s15 = sphi 0, %s27
    %s16 = sphi 0, %s23
    %s17 = sphi 0, %s15
    %s18 = sphi 0, %s16
    %s19 = sphi 0, %s17
    %s20 = sphi 0, %s18
    %s32 = sphi 0, %s34
    %s35 = sphi 0, %s32
    %s36 = sphi 0, %s35
    %s52 = sphi 0, %s36
    %s60 = sphi 0, %s62
    %s63 = sphi 0, %s60
    %s64 = sphi 0, %s63
    %s80 = sphi 0, %s64
    %s86 = sphi 0, %s88
    %s89 = sphi 0, %s86
    %s90 = sphi 0, %s89
    %s106 = sphi 0, %s90
  $region4: #{simple_trainer_forward.1} parent=0 // loop_header_branch
    %11 = sbr.rel (%p9) target = $region8
  $region5: #{simple_trainer_forward.1} parent=0 // loop_body
    %s13 = ssub.s32 %s8, 1
    %s14 = ssub.s32 %s8, 2
    %s21 = sadd.s32 1, %s16
    %p22 = scmp.ge.s32.totalorder %s21, 1
    %s23 = scalar_select %p22, 0, %s21
    %s24 = sadd.s32 1, %s15
    %s25 = scalar_select %p22, %s24, %s15
    %p26 = scmp.ge.s32.totalorder %s25, 2
    %s27 = scalar_select %p26, 0, %s25
    %s28 = sadd.s32 %s15, %s16
    %s29 = sadd.s32 %s27, %s23
    %s30 = ssub.s32 %s28, %s29
    %p31 = scmp.eq.s32.totalorder %s30, 0
    %s33 = sadd.s32 %s32, 1
    %s34 = scalar_select %p31, %s32, %s33
    %p37 = pneg %p31
    %p38 = scmp.eq.s32.totalorder %s8, 1
    %p39 = por %p37, %p38
    %p40 = scmp.ne.s32.totalorder %s32, %s35
    %p41 = scmp.eq.s32.totalorder %s8, 0
    %p42 = por %p40, %p41
    %p43 = scmp.ne.s32.totalorder %s32, %s35
    %p44 = scmp.eq.s32.totalorder %s13, 1
    %p45 = por %p43, %p44
    %p46 = scmp.ne.s32.totalorder %s35, %s36
    %p47 = scmp.eq.s32.totalorder %s13, 0
    %p48 = por %p46, %p47
    %p49 = scmp.ne.s32.totalorder %s35, %s36
    %p50 = scmp.eq.s32.totalorder %s14, 1
    %p51 = por %p49, %p50
    %p53 = scmp.ne.s32.totalorder %s36, %s52
    %p54 = scmp.eq.s32.totalorder %s14, 0
    %p55 = por %p53, %p54
    %s56 = sadd.s32 %s15, %s16
    %s57 = sadd.s32 %s27, %s23
    %s58 = ssub.s32 %s56, %s57
    %p59 = scmp.eq.s32.totalorder %s58, 0
    %s61 = sadd.s32 %s60, 1
    %s62 = scalar_select %p59, %s60, %s61
    %p65 = pneg %p59
    %p66 = scmp.eq.s32.totalorder %s8, 1
    %p67 = por %p65, %p66
    %p68 = scmp.ne.s32.totalorder %s60, %s63
    %p69 = scmp.eq.s32.totalorder %s8, 0
    %p70 = por %p68, %p69
    %p71 = scmp.ne.s32.totalorder %s60, %s63
    %p72 = scmp.eq.s32.totalorder %s13, 1
    %p73 = por %p71, %p72
    %p74 = scmp.ne.s32.totalorder %s63, %s64
    %p75 = scmp.eq.s32.totalorder %s13, 0
    %p76 = por %p74, %p75
    %p77 = scmp.ne.s32.totalorder %s63, %s64
    %p78 = scmp.eq.s32.totalorder %s14, 1
    %p79 = por %p77, %p78
    %p81 = scmp.ne.s32.totalorder %s64, %s80
    %p82 = scmp.eq.s32.totalorder %s14, 0
    %p83 = por %p81, %p82
    %s84 = ssub.s32 %s15, %s27
    %p85 = scmp.eq.s32.totalorder %s84, 0
    %s87 = sadd.s32 %s86, 1
    %s88 = scalar_select %p85, %s86, %s87
    %p91 = pneg %p85
    %p92 = scmp.eq.s32.totalorder %s8, 1
    %p93 = por %p91, %p92
    %p94 = scmp.ne.s32.totalorder %s86, %s89
    %p95 = scmp.eq.s32.totalorder %s8, 0
    %p96 = por %p94, %p95
    %p97 = scmp.ne.s32.totalorder %s86, %s89
    %p98 = scmp.eq.s32.totalorder %s13, 1
    %p99 = por %p97, %p98
    %p100 = scmp.ne.s32.totalorder %s89, %s90
    %p101 = scmp.eq.s32.totalorder %s13, 0
    %p102 = por %p100, %p101
    %p103 = scmp.ne.s32.totalorder %s89, %s90
    %p104 = scmp.eq.s32.totalorder %s14, 1
    %p105 = por %p103, %p104
    %p107 = scmp.ne.s32.totalorder %s90, %s106
    %p108 = scmp.eq.s32.totalorder %s14, 0
    %p109 = por %p107, %p108
    %p110 = scmp.le.s32.totalorder 1, %s8
    %p111 = scmp.lt.s32.totalorder %s8, 3
    %p112 = pnand %p110, %p111
    %p113 = pneg %p112
    // Predicated region
    $region9: #{simple_trainer_forward.1} parent=5 // pred_check
      _
    $region10: #{simple_trainer_forward.1} parent=5 // pred_check_branch
      %115 = sbr.rel (%p112) target = $region12
    $region11: #{simple_trainer_forward.1} parent=5 // pred_region
      %s116 = ssub.s32 %s8, 1
    $region12: #{simple_trainer_forward.1} parent=5 // pred_fallthru
      _
    %p117 = scmp.lt.s32.totalorder %s8, 2
    // Predicated region
    $region13: #{simple_trainer_forward.1} parent=5 // pred_check
      %p118 = pneg %p117
    $region14: #{simple_trainer_forward.1} parent=5 // pred_check_branch
      %120 = sbr.rel (%p118) target = $region16
    $region15: #{simple_trainer_forward.1} parent=5 // pred_region
      // Predicated region
      $region17: #{simple_trainer_forward.1} parent=15 // pred_check
        %p121 = pneg %p42
      $region18: #{simple_trainer_forward.1} parent=15 // pred_check_branch
        %123 = sbr.rel (%p121) target = $region20
      $region19: #{simple_trainer_forward.1} parent=15 // pred_region
        %s124 = sadd.s32 %s15, %s16
        %s125 = smul.u32 4, %s124
        %p126 = scmp.lt.s32.totalorder %s125, 7
        %s127 = scalar_select %p126, %s125, 7
        %s128 = smul.addr %s127, 4
        %s129 = smul.addr %s128, 8
        %s130 = scalar_lea.vmem %s0, %s129
        %s131 = sadd.s32 %s15, %s16
        %s132 = smul.u32 4, %s131
      $region20: #{simple_trainer_forward.1} parent=15 // pred_fallthru
        _
      // Predicated region
      $region21: #{simple_trainer_forward.1} parent=15 // pred_check
        %p133 = pneg %p70
      $region22: #{simple_trainer_forward.1} parent=15 // pred_check_branch
        %135 = sbr.rel (%p133) target = $region24
      $region23: #{simple_trainer_forward.1} parent=15 // pred_region
        %s136 = sadd.s32 %s15, %s16
        %p137 = scmp.lt.s32.totalorder %s136, 1
        %s138 = scalar_select %p137, %s136, 1
        %s139 = smul.addr %s138, 4
        %s140 = smul.addr %s139, 8
        %s141 = scalar_lea.vmem %s1, %s140
        %s142 = sadd.s32 %s15, %s16
      $region24: #{simple_trainer_forward.1} parent=15 // pred_fallthru
        _
    $region16: #{simple_trainer_forward.1} parent=5 // pred_fallthru
      _
    %p143 = scmp.le.s32.totalorder 1, %s8
    %p144 = scmp.lt.s32.totalorder %s8, 3
    %p145 = pnand %p143, %p144
    %p146 = pneg %p145
    // Predicated region
    $region25: #{simple_trainer_forward.1} parent=5 // pred_check
      _
    $region26: #{simple_trainer_forward.1} parent=5 // pred_check_branch
      %148 = sbr.rel (%p145) target = $region28
    $region27: #{simple_trainer_forward.1} parent=5 // pred_region
      %s149 = ssub.s32 %s8, 1
      %s150 = sadd.s32 %s17, %s18
      %s151 = smul.u32 4, %s150
      %p152 = scmp.lt.s32.totalorder %s151, 7
      %s153 = scalar_select %p152, %s151, 7
      %s154 = smul.addr %s153, 4
      %s155 = smul.addr %s154, 8
      %s156 = scalar_lea.vmem %s0, %s155
      %p157 = pneg %p48
      %p158 = pneg %p45
      %s159 = sadd.s32 %s17, %s18
      %p160 = scmp.lt.s32.totalorder %s159, 1
      %s161 = scalar_select %p160, %s159, 1
      %s162 = smul.addr %s161, 4
      %s163 = smul.addr %s162, 8
      %s164 = scalar_lea.vmem %s1, %s163
      %p165 = pneg %p76
      %p166 = pneg %p73
      %p167 = pneg %p102
      %p168 = pneg %p99
      %p169 = scmp.lt.s32.totalorder %s17, 1
      %s170 = scalar_select %p169, %s17, 1
      %s171 = smul.addr %s170, 8
      %s172 = scalar_lea.vmem %s2, %s171
      %s173 = sadd.s32 %s17, %s18
      %s174 = smul.u32 4, %s173
      %p175 = scmp.lt.s32.totalorder %s174, 7
      %s176 = scalar_select %p175, %s174, 7
      %s177 = smul.addr %s176, 4
      %s178 = smul.addr %s177, 8
      %s179 = scalar_lea.vmem %s0, %s178
      %s180 = sadd.s32 %s17, %s18
      %s181 = smul.u32 4, %s180
      %s182 = sadd.s32 %s17, %s18
      %p183 = scmp.lt.s32.totalorder %s182, 1
      %s184 = scalar_select %p183, %s182, 1
      %s185 = smul.addr %s184, 4
      %s186 = smul.addr %s185, 8
      %s187 = scalar_lea.vmem %s1, %s186
      %s188 = sadd.s32 %s17, %s18
      %p189 = scmp.lt.s32.totalorder %s17, 1
      %s190 = scalar_select %p189, %s17, 1
      %s191 = smul.addr %s190, 8
      %s192 = scalar_lea.vmem %s2, %s191
      %p193 = scmp.eq.s32.totalorder %s18, 0
      // Predicated region
      $region29: #{simple_trainer_forward.1} parent=27 // pred_check
        %p194 = pneg %p193
      $region30: #{simple_trainer_forward.1} parent=27 // pred_check_branch
        %196 = sbr.rel (%p194) target = $region32
      $region31: #{simple_trainer_forward.1} parent=27 // pred_region
        %197 = vst [vmem:[#allocation2] sm:$0xff] 0.0
        %198 = vst [vmem:[#allocation2 + $0x8] sm:$0xff] 0.0
        %199 = vst [vmem:[#allocation2 + $0x10] sm:$0xff] 0.0
        %200 = vst [vmem:[#allocation2 + $0x18] sm:$0xff] 0.0
        %201 = vst [vmem:[#allocation2 + $0x20] sm:$0xff] 0.0
        %202 = vst [vmem:[#allocation2 + $0x28] sm:$0xff] 0.0
        %203 = vst [vmem:[#allocation2 + $0x30] sm:$0xff] 0.0
        %204 = vst [vmem:[#allocation2 + $0x38] sm:$0xff] 0.0
        %205 = vst [vmem:[#allocation2 + $0x40] sm:$0xff] 0.0
        %206 = vst [vmem:[#allocation2 + $0x48] sm:$0xff] 0.0
        %207 = vst [vmem:[#allocation2 + $0x50] sm:$0xff] 0.0
        %208 = vst [vmem:[#allocation2 + $0x58] sm:$0xff] 0.0
        %209 = vst [vmem:[#allocation2 + $0x60] sm:$0xff] 0.0
        %210 = vst [vmem:[#allocation2 + $0x68] sm:$0xff] 0.0
        %211 = vst [vmem:[#allocation2 + $0x70] sm:$0xff] 0.0
        %212 = vst [vmem:[#allocation2 + $0x78] sm:$0xff] 0.0
      $region32: #{simple_trainer_forward.1} parent=27 // pred_fallthru
        _
      %v213 = vld [vmem:[#allocation2] sm:$0xff]
      %v214 = vld [vmem:[#allocation2 + $0x8] sm:$0xff]
      %v215 = vld [vmem:[#allocation2 + $0x10] sm:$0xff]
      %v216 = vld [vmem:[#allocation2 + $0x18] sm:$0xff]
      %v217 = vld [vmem:[#allocation2 + $0x20] sm:$0xff]
      %v218 = vld [vmem:[#allocation2 + $0x28] sm:$0xff]
      %v219 = vld [vmem:[#allocation2 + $0x30] sm:$0xff]
      %v220 = vld [vmem:[#allocation2 + $0x38] sm:$0xff]
      %v221 = vld [vmem:[#allocation2 + $0x40] sm:$0xff]
      %v222 = vld [vmem:[#allocation2 + $0x48] sm:$0xff]
      %v223 = vld [vmem:[#allocation2 + $0x50] sm:$0xff]
      %v224 = vld [vmem:[#allocation2 + $0x58] sm:$0xff]
      %v225 = vld [vmem:[#allocation2 + $0x60] sm:$0xff]
      %v226 = vld [vmem:[#allocation2 + $0x68] sm:$0xff]
      %v227 = vld [vmem:[#allocation2 + $0x70] sm:$0xff]
      %v228 = vld [vmem:[#allocation2 + $0x78] sm:$0xff]
      %v229 = vld [vmem:[%s179] sm:$0xff]
      %v230 = vld [vmem:[%s179 + $0x8] sm:$0xff]
      %v231 = vld [vmem:[%s179 + $0x10] sm:$0xff]
      %v232 = vld [vmem:[%s179 + $0x18] sm:$0xff]
      %v233 = vld [vmem:[%s179 + $0x20] sm:$0xff]
      %v234 = vld [vmem:[%s179 + $0x28] sm:$0xff]
      %v235 = vld [vmem:[%s179 + $0x30] sm:$0xff]
      %v236 = vld [vmem:[%s179 + $0x38] sm:$0xff]
      %v237 = vld [vmem:[%s179 + $0x40] sm:$0xff]
      %v238 = vld [vmem:[%s179 + $0x48] sm:$0xff]
      %v239 = vld [vmem:[%s179 + $0x50] sm:$0xff]
      %v240 = vld [vmem:[%s179 + $0x58] sm:$0xff]
      %v241 = vld [vmem:[%s179 + $0x60] sm:$0xff]
      %v242 = vld [vmem:[%s179 + $0x68] sm:$0xff]
      %v243 = vld [vmem:[%s179 + $0x70] sm:$0xff]
      %v244 = vld [vmem:[%s179 + $0x78] sm:$0xff]
      %v245 = vld [vmem:[%s187] sm:$0xff]
      %v246 = vld [vmem:[%s187 + $0x8] sm:$0xff]
      %v247 = vld [vmem:[%s187 + $0x10] sm:$0xff]
      %v248 = vld [vmem:[%s187 + $0x18] sm:$0xff]
      %v249 = vunpack.c.0.s8 %v245
      %v250 = vunpack.c.0.s8 %v246
      %v251 = vunpack.c.0.s8 %v247
      %v252 = vunpack.c.0.s8 %v248
      %v253 = vunpack.c.1.s8 %v245
      %v254 = vunpack.c.1.s8 %v246
      %v255 = vunpack.c.1.s8 %v247
      %v256 = vunpack.c.1.s8 %v248
      %v257 = vunpack.c.2.s8 %v245
      %v258 = vunpack.c.2.s8 %v246
      %v259 = vunpack.c.2.s8 %v247
      %v260 = vunpack.c.2.s8 %v248
      %v261 = vunpack.c.3.s8 %v245
      %v262 = vunpack.c.3.s8 %v246
      %v263 = vunpack.c.3.s8 %v247
      %v264 = vunpack.c.3.s8 %v248
      %v265 = vand.u32 %v249, 255
      %v266 = vand.u32 %v250, 255
      %v267 = vand.u32 %v251, 255
      %v268 = vand.u32 %v252, 255
      %v269 = vand.u32 %v253, 255
      %v270 = vand.u32 %v254, 255
      %v271 = vand.u32 %v255, 255
      %v272 = vand.u32 %v256, 255
      %v273 = vand.u32 %v257, 255
      %v274 = vand.u32 %v258, 255
      %v275 = vand.u32 %v259, 255
      %v276 = vand.u32 %v260, 255
      %v277 = vand.u32 %v261, 255
      %v278 = vand.u32 %v262, 255
      %v279 = vand.u32 %v263, 255
      %v280 = vand.u32 %v264, 255
      %v281 = vcvt.s32.f32 %v265
      %v282 = vcvt.s32.f32 %v266
      %v283 = vcvt.s32.f32 %v267
      %v284 = vcvt.s32.f32 %v268
      %v285 = vcvt.s32.f32 %v269
      %v286 = vcvt.s32.f32 %v270
      %v287 = vcvt.s32.f32 %v271
      %v288 = vcvt.s32.f32 %v272
      %v289 = vcvt.s32.f32 %v273
      %v290 = vcvt.s32.f32 %v274
      %v291 = vcvt.s32.f32 %v275
      %v292 = vcvt.s32.f32 %v276
      %v293 = vcvt.s32.f32 %v277
      %v294 = vcvt.s32.f32 %v278
      %v295 = vcvt.s32.f32 %v279
      %v296 = vcvt.s32.f32 %v280
      %v297 = vsub.f32 %v229, %v281
      %v298 = vsub.f32 %v230, %v282
      %v299 = vsub.f32 %v231, %v283
      %v300 = vsub.f32 %v232, %v284
      %v301 = vsub.f32 %v233, %v285
      %v302 = vsub.f32 %v234, %v286
      %v303 = vsub.f32 %v235, %v287
      %v304 = vsub.f32 %v236, %v288
      %v305 = vsub.f32 %v237, %v289
      %v306 = vsub.f32 %v238, %v290
      %v307 = vsub.f32 %v239, %v291
      %v308 = vsub.f32 %v240, %v292
      %v309 = vsub.f32 %v241, %v293
      %v310 = vsub.f32 %v242, %v294
      %v311 = vsub.f32 %v243, %v295
      %v312 = vsub.f32 %v244, %v296
      %v313 = vand.u32 2147483647, %v297
      %v314 = vand.u32 2147483647, %v298
      %v315 = vand.u32 2147483647, %v299
      %v316 = vand.u32 2147483647, %v300
      %v317 = vand.u32 2147483647, %v301
      %v318 = vand.u32 2147483647, %v302
      %v319 = vand.u32 2147483647, %v303
      %v320 = vand.u32 2147483647, %v304
      %v321 = vand.u32 2147483647, %v305
      %v322 = vand.u32 2147483647, %v306
      %v323 = vand.u32 2147483647, %v307
      %v324 = vand.u32 2147483647, %v308
      %v325 = vand.u32 2147483647, %v309
      %v326 = vand.u32 2147483647, %v310
      %v327 = vand.u32 2147483647, %v311
      %v328 = vand.u32 2147483647, %v312
      %v329 = vadd.f32 %v213, %v313
      %v330 = vadd.f32 %v214, %v314
      %v331 = vadd.f32 %v215, %v315
      %v332 = vadd.f32 %v216, %v316
      %v333 = vadd.f32 %v217, %v317
      %v334 = vadd.f32 %v218, %v318
      %v335 = vadd.f32 %v219, %v319
      %v336 = vadd.f32 %v220, %v320
      %v337 = vadd.f32 %v221, %v321
      %v338 = vadd.f32 %v222, %v322
      %v339 = vadd.f32 %v223, %v323
      %v340 = vadd.f32 %v224, %v324
      %v341 = vadd.f32 %v225, %v325
      %v342 = vadd.f32 %v226, %v326
      %v343 = vadd.f32 %v227, %v327
      %v344 = vadd.f32 %v228, %v328
      %345 = vst [vmem:[#allocation2] sm:$0xff] %v329
      %346 = vst [vmem:[#allocation2 + $0x8] sm:$0xff] %v330
      %347 = vst [vmem:[#allocation2 + $0x10] sm:$0xff] %v331
      %348 = vst [vmem:[#allocation2 + $0x18] sm:$0xff] %v332
      %349 = vst [vmem:[#allocation2 + $0x20] sm:$0xff] %v333
      %350 = vst [vmem:[#allocation2 + $0x28] sm:$0xff] %v334
      %351 = vst [vmem:[#allocation2 + $0x30] sm:$0xff] %v335
      %352 = vst [vmem:[#allocation2 + $0x38] sm:$0xff] %v336
      %353 = vst [vmem:[#allocation2 + $0x40] sm:$0xff] %v337
      %354 = vst [vmem:[#allocation2 + $0x48] sm:$0xff] %v338
      %355 = vst [vmem:[#allocation2 + $0x50] sm:$0xff] %v339
      %356 = vst [vmem:[#allocation2 + $0x58] sm:$0xff] %v340
      %357 = vst [vmem:[#allocation2 + $0x60] sm:$0xff] %v341
      %358 = vst [vmem:[#allocation2 + $0x68] sm:$0xff] %v342
      %359 = vst [vmem:[#allocation2 + $0x70] sm:$0xff] %v343
      %360 = vst [vmem:[#allocation2 + $0x78] sm:$0xff] %v344
      // Predicated region
      $region33: #{simple_trainer_forward.1} parent=27 // pred_check
        %p361 = pneg %p193
      $region34: #{simple_trainer_forward.1} parent=27 // pred_check_branch
        %363 = sbr.rel (%p361) target = $region36
      $region35: #{simple_trainer_forward.1} parent=27 // pred_region
        %v364 = vld [vmem:[#allocation2] sm:$0xff]
        %v365 = vld [vmem:[#allocation2 + $0x8] sm:$0xff]
        %v366 = vld [vmem:[#allocation2 + $0x10] sm:$0xff]
        %v367 = vld [vmem:[#allocation2 + $0x18] sm:$0xff]
        %v368 = vld [vmem:[#allocation2 + $0x20] sm:$0xff]
        %v369 = vld [vmem:[#allocation2 + $0x28] sm:$0xff]
        %v370 = vld [vmem:[#allocation2 + $0x30] sm:$0xff]
        %v371 = vld [vmem:[#allocation2 + $0x38] sm:$0xff]
        %v372 = vld [vmem:[#allocation2 + $0x40] sm:$0xff]
        %v373 = vld [vmem:[#allocation2 + $0x48] sm:$0xff]
        %v374 = vld [vmem:[#allocation2 + $0x50] sm:$0xff]
        %v375 = vld [vmem:[#allocation2 + $0x58] sm:$0xff]
        %v376 = vld [vmem:[#allocation2 + $0x60] sm:$0xff]
        %v377 = vld [vmem:[#allocation2 + $0x68] sm:$0xff]
        %v378 = vld [vmem:[#allocation2 + $0x70] sm:$0xff]
        %v379 = vld [vmem:[#allocation2 + $0x78] sm:$0xff]
        %v380 = vadd.f32 %v364, %v365
        %v381 = vadd.f32 %v380, %v366
        %v382 = vadd.f32 %v381, %v367
        %v383 = vadd.f32 %v382, %v368
        %v384 = vadd.f32 %v383, %v369
        %v385 = vadd.f32 %v384, %v370
        %v386 = vadd.f32 %v385, %v371
        %v387 = vadd.f32 %v386, %v372
        %v388 = vadd.f32 %v387, %v373
        %v389 = vadd.f32 %v388, %v374
        %v390 = vadd.f32 %v389, %v375
        %v391 = vadd.f32 %v390, %v376
        %v392 = vadd.f32 %v391, %v377
        %v393 = vadd.f32 %v392, %v378
        %v394 = vadd.f32 %v393, %v379
        %395 = vadd.xlane.f32.xlu0 %v394
        %v396 = vpop.xlane.xlu0 %395
        %v397 = vrot.slane %v396, 4
        %v398 = vadd.f32 %v396, %v397
        %v399 = vrot.slane %v398, 2
        %v400 = vadd.f32 %v398, %v399
        %v401 = vrot.slane %v400, 1
        %v402 = vadd.f32 %v400, %v401
        %s403 = vtos %v402
        %v404 = vlaneseq
        %v405 = vshrl.u32 %v404, 7
        %v406 = vlaneseq
        %v407 = vand.u32 %v406, 127
        %vm408 = vcmp.eq.s32.totalorder %v405, 0
        %vm409 = vcmp.eq.s32.totalorder %v407, 0
        %vm410 = vmand %vm408, %vm409
        %v411 = vstv %s403
        %v412 = vsel %vm410, %v411, 0.0
        %413 = vst [vmem:[%s192] sm:$0xff] %v412
      $region36: #{simple_trainer_forward.1} parent=27 // pred_fallthru
        _
      %p414 = scmp.lt.s32.totalorder %s17, 1
      %s415 = scalar_select %p414, %s17, 1
      %s416 = smul.addr %s415, 8
      %s417 = scalar_lea.vmem %s2, %s416
      // Predicated region
      $region37: #{simple_trainer_forward.1} parent=27 // pred_check
        %p418 = pneg %p99
      $region38: #{simple_trainer_forward.1} parent=27 // pred_check_branch
        %420 = sbr.rel (%p418) target = $region40
      $region39: #{simple_trainer_forward.1} parent=27 // pred_region
        _
      $region40: #{simple_trainer_forward.1} parent=27 // pred_fallthru
        _
    $region28: #{simple_trainer_forward.1} parent=5 // pred_fallthru
      _
    %p421 = scmp.le.s32.totalorder 2, %s8
    // Predicated region
    $region41: #{simple_trainer_forward.1} parent=5 // pred_check
      %p422 = pneg %p421
    $region42: #{simple_trainer_forward.1} parent=5 // pred_check_branch
      %424 = sbr.rel (%p422) target = $region44
    $region43: #{simple_trainer_forward.1} parent=5 // pred_region
      %s425 = ssub.s32 %s8, 2
      // Predicated region
      $region45: #{simple_trainer_forward.1} parent=43 // pred_check
        %p426 = pneg %p105
      $region46: #{simple_trainer_forward.1} parent=43 // pred_check_branch
        %428 = sbr.rel (%p426) target = $region48
      $region47: #{simple_trainer_forward.1} parent=43 // pred_region
        %p429 = scmp.lt.s32.totalorder %s19, 1
        %s430 = scalar_select %p429, %s19, 1
        %s431 = smul.addr %s430, 8
        %s432 = scalar_lea.vmem %s2, %s431
      $region48: #{simple_trainer_forward.1} parent=43 // pred_fallthru
        _
    $region44: #{simple_trainer_forward.1} parent=5 // pred_fallthru
      _
  $region6: #{simple_trainer_forward.1} parent=0 // loop_footer
    %s12 = sadd.s32 1, %s8
  $region7: #{simple_trainer_forward.1} parent=0 // loop_footer_branch
    %7 = sbr.rel target = $region3
  $region8: #{simple_trainer_forward.1} parent=0 // loop_exit
    _

</llo_original>
